<compile_context>
chip_gen: v7x
topology: tpu7x:2x2x1
jax: 0.10.0
libtpu: 0.0.40
codegen_flags: <defaults>
</compile_context>

<pallas_src>
import functools

import jax
import jax.numpy as jnp
from jax.experimental import pallas as pl
from jax.experimental.pallas import tpu as pltpu

# Full-array VMEM block (for the small grid-less kernels).
_VMEM = functools.partial(pl.BlockSpec, memory_space=pltpu.MemorySpace.VMEM)


def _ln_rows(x, g, b):
    """Row-wise LayerNorm (f32, eps=1e-5 like nn.LayerNorm)."""
    mu = jnp.mean(x, axis=-1, keepdims=True)
    xc = x - mu
    var = jnp.mean(xc * xc, axis=-1, keepdims=True)
    return xc * jax.lax.rsqrt(var + 1e-5) * g + b


# --------------------------------------------------------------------------
# Fused transformer block kernel (one pallas_call per block, grid over batch)
# --------------------------------------------------------------------------
def _block_kernel(n_heads, causal,
                  x_ref, g1_ref, b1_ref, wqkv_ref, bqkv_ref, wo_ref, bo_ref,
                  g2_ref, b2_ref, w1_ref, bb1_ref, w2_ref, bb2_ref, o_ref):
    S, D = x_ref.shape
    dh = D // n_heads
    scale = 1.0 / (dh ** 0.5)

    x = x_ref[...]                                              # (S, D) f32

    # ---- attention branch -------------------------------------------------
    h = _ln_rows(x, g1_ref[...], b1_ref[...])
    qkv = jnp.dot(h.astype(jnp.bfloat16), wqkv_ref[...],
                  preferred_element_type=jnp.float32) + bqkv_ref[...]  # (S,3D)

    if causal:
        rows = jax.lax.broadcasted_iota(jnp.int32, (S, S), 0)
        cols = jax.lax.broadcasted_iota(jnp.int32, (S, S), 1)
        keep = cols <= rows

    attn_proj = jnp.zeros((S, D), jnp.float32)
    for hd in range(n_heads):                                   # static unroll
        lo = hd * dh
        qh = qkv[:, lo:lo + dh]
        kh = qkv[:, D + lo:D + lo + dh]
        vh = qkv[:, 2 * D + lo:2 * D + lo + dh]
        s = jax.lax.dot_general(
            qh.astype(jnp.bfloat16), kh.astype(jnp.bfloat16),
            (((1,), (1,)), ((), ())),
            preferred_element_type=jnp.float32) * scale          # (S, S)
        if causal:
            s = jnp.where(keep, s, -1e9)
        s = s - jnp.max(s, axis=-1, keepdims=True)
        p = jnp.exp(s)
        p = p * pl.reciprocal(jnp.sum(p, axis=-1, keepdims=True), approx=True)
        oh = jnp.dot(p.astype(jnp.bfloat16), vh.astype(jnp.bfloat16),
                     preferred_element_type=jnp.float32)         # (S, dh)
        # per-head slice of the output projection (avoids lane concat)
        attn_proj = attn_proj + jnp.dot(
            oh.astype(jnp.bfloat16), wo_ref[lo:lo + dh, :],
            preferred_element_type=jnp.float32)

    x = x + attn_proj + bo_ref[...]                              # residual

    # ---- MLP branch ---------------------------------------------------------
    h2 = _ln_rows(x, g2_ref[...], b2_ref[...])
    hm = jnp.dot(h2.astype(jnp.bfloat16), w1_ref[...],
                 preferred_element_type=jnp.float32) + bb1_ref[...]
    # TODO(synk): PyTorch nn.GELU default is exact erf; tanh approximation used.
    hm = jax.nn.gelu(hm, approximate=True)
    x = x + jnp.dot(hm.astype(jnp.bfloat16), w2_ref[...],
                    preferred_element_type=jnp.float32) + bb2_ref[...]

    o_ref[...] = x


def _rep2(shape):
    # Whole-array block replicated across the batch grid (all params are 2D).
    return pl.BlockSpec(shape, lambda b: (0, 0))


def transformer_block(x, p, n_heads, causal):
    B, S, D = x.shape
    seq_spec = pl.BlockSpec((None, S, D), lambda b: (b, 0, 0))
    weights = [p['ln1_g'], p['ln1_b'], p['w_qkv'], p['b_qkv'], p['w_o'],
               p['b_o'], p['ln2_g'], p['ln2_b'], p['w_fc1'], p['b_fc1'],
               p['w_fc2'], p['b_fc2']]
    return pl.pallas_call(
        functools.partial(_block_kernel, n_heads, causal),
        out_shape=jax.ShapeDtypeStruct((B, S, D), jnp.float32),
        grid=(B,),
        in_specs=[seq_spec] + [_rep2(w.shape) for w in weights],
        out_specs=seq_spec,
        compiler_params=pltpu.CompilerParams(
            dimension_semantics=("parallel",)),
    )(x, *weights)


# --------------------------------------------------------------------------
# Small fused helper kernels (stem / head / loss)
# --------------------------------------------------------------------------
def _patch_embed_kernel(x_ref, w_ref, o_ref):
    # conv1(patch, stride=patch, bias=False) == patchify + matmul
    o_ref[...] = jnp.dot(x_ref[...].astype(jnp.bfloat16), w_ref[...],
                         preferred_element_type=jnp.float32)


def patch_embed(patches, w):
    m = patches.shape[0]
    n = w.shape[1]
    return pl.pallas_call(
        _patch_embed_kernel,
        out_shape=jax.ShapeDtypeStruct((m, n), jnp.float32),
        in_specs=[_VMEM(), _VMEM()],
        out_specs=_VMEM(),
    )(patches, w)


def _posln_kernel(x_ref, pos_ref, g_ref, b_ref, o_ref):
    # (tokens + positional embedding) followed by ln_pre, fused.
    o_ref[...] = _ln_rows(x_ref[...] + pos_ref[...], g_ref[...], b_ref[...])


def add_pos_layernorm(x, pos, g, b):
    B, S, D = x.shape
    seq_spec = pl.BlockSpec((None, S, D), lambda i: (i, 0, 0))
    return pl.pallas_call(
        _posln_kernel,
        out_shape=jax.ShapeDtypeStruct((B, S, D), jnp.float32),
        grid=(B,),
        in_specs=[seq_spec, _rep2(pos.shape), _rep2(g.shape), _rep2(b.shape)],
        out_specs=seq_spec,
        compiler_params=pltpu.CompilerParams(
            dimension_semantics=("parallel",)),
    )(x, pos, g, b)


def _head_kernel(x_ref, g_ref, b_ref, w_ref, o_ref):
    # final LayerNorm -> linear projection (no bias) -> F.normalize, fused.
    x = _ln_rows(x_ref[...], g_ref[...], b_ref[...])
    e = jnp.dot(x.astype(jnp.bfloat16), w_ref[...],
                preferred_element_type=jnp.float32)
    nrm2 = jnp.sum(e * e, axis=-1, keepdims=True)
    o_ref[...] = e * jax.lax.rsqrt(jnp.maximum(nrm2, 1e-24))  # F.normalize eps


def head_project(pooled, g, b, w):
    m = pooled.shape[0]
    e = w.shape[1]
    return pl.pallas_call(
        _head_kernel,
        out_shape=jax.ShapeDtypeStruct((m, e), jnp.float32),
        in_specs=[_VMEM()] * 4,
        out_specs=_VMEM(),
    )(pooled, g, b, w)


def _clip_loss_kernel(inv_temp, img_ref, txt_ref, loss_ref):
    img = img_ref[...]
    txt = txt_ref[...]
    sim = jnp.einsum('ie,je->ij', img, txt,
                     preferred_element_type=jnp.float32) * inv_temp
    b = sim.shape[0]
    rows = jax.lax.broadcasted_iota(jnp.int32, (b, b), 0)
    cols = jax.lax.broadcasted_iota(jnp.int32, (b, b), 1)
    eye = rows == cols
    diag_col = jnp.sum(jnp.where(eye, sim, 0.0), axis=-1, keepdims=True)  # (b,1)
    diag_row = jnp.sum(jnp.where(eye, sim, 0.0), axis=0, keepdims=True)   # (1,b)
    m_i = jnp.max(sim, axis=-1, keepdims=True)
    lse_i = m_i + jnp.log(jnp.sum(jnp.exp(sim - m_i), axis=-1, keepdims=True))
    m_t = jnp.max(sim, axis=0, keepdims=True)
    lse_t = m_t + jnp.log(jnp.sum(jnp.exp(sim - m_t), axis=0, keepdims=True))
    loss_i = jnp.mean(lse_i - diag_col, keepdims=True)   # (1,1)
    loss_t = jnp.mean(lse_t - diag_row, keepdims=True)   # (1,1)
    loss_ref[...] = 0.5 * (loss_i + loss_t)


def clip_loss(image_feat, text_feat, temp):
    out = pl.pallas_call(
        functools.partial(_clip_loss_kernel, float(1.0 / temp)),
        out_shape=jax.ShapeDtypeStruct((1, 1), jnp.float32),
        in_specs=[_VMEM(), _VMEM()],
        out_specs=_VMEM(),
    )(image_feat, text_feat)
    return out[0, 0]


# --------------------------------------------------------------------------
# Model glue (composition of Pallas kernels; reshapes / gathers in plain JAX)
# --------------------------------------------------------------------------
def vision_transformer(image, p, n_heads):
    B, C, H, W = image.shape
    ps = p['patch_size']
    gh, gw = H // ps, W // ps
    patches = image.reshape(B, C, gh, ps, gw, ps)
    patches = patches.transpose(0, 2, 4, 1, 3, 5).reshape(B * gh * gw,
                                                          C * ps * ps)
    D = p['w_patch'].shape[1]
    emb = patch_embed(patches, p['w_patch']).reshape(B, gh * gw, D)
    cls = jnp.broadcast_to(p['cls'][None], (B, 1, D))
    x = jnp.concatenate([cls, emb], axis=1)                 # (B, S, D)
    x = add_pos_layernorm(x, p['pos_embed'], p['ln_pre_g'], p['ln_pre_b'])
    for blk in p['blocks']:
        x = transformer_block(x, blk, n_heads, causal=False)
    pooled = x[:, 0, :]                                     # pool_type='tok'
    return head_project(pooled, p['ln_post_g'], p['ln_post_b'], p['proj'])


def text_transformer(text_ids, p, n_heads):
    B, L = text_ids.shape
    # token embedding gather + positional add (XLA glue)
    x = jnp.take(p['tok_embed'], text_ids, axis=0) + p['pos_embed'][None]
    for blk in p['blocks']:
        x = transformer_block(x, blk, n_heads, causal=True)
    eot = jnp.argmax(text_ids, axis=-1)                     # pool_type='argmax'
    pooled = x[jnp.arange(B), eot]                          # (B, D)
    return head_project(pooled, p['ln_f_g'], p['ln_f_b'], p['proj'])  # no bias


def clip_forward(params, image, text_ids, idx=None, text_idx=None,
                 epoch=0, max_epoch=1, temp=0.01, return_feat=False):
    # criterion.adjust_hyperparams(epoch): no-op for ita_type='clip'.
    # learnable_temp=False default -> no temp clamping.
    image_feat = vision_transformer(image, params['visual'], params['v_heads'])
    text_feat = text_transformer(text_ids, params['text'], params['t_heads'])
    if return_feat:
        return image_feat, text_feat
    # TODO(synk): torch.distributed concat_all_gather omitted (world_size=1).
    loss_ita = clip_loss(image_feat, text_feat, temp)
    return loss_ita, {}


# --------------------------------------------------------------------------
# Deterministic parameter init (synthetic; no checkpoint loading)
# --------------------------------------------------------------------------
def _init_block(key, d, hidden):
    ks = jax.random.split(key, 4)
    s = 0.02
    f32, bf16 = jnp.float32, jnp.bfloat16
    return dict(
        ln1_g=jnp.ones((1, d), f32), ln1_b=jnp.zeros((1, d), f32),
        w_qkv=(s * jax.random.normal(ks[0], (d, 3 * d), f32)).astype(bf16),
        b_qkv=jnp.zeros((1, 3 * d), f32),
        w_o=(s * jax.random.normal(ks[1], (d, d), f32)).astype(bf16),
        b_o=jnp.zeros((1, d), f32),
        ln2_g=jnp.ones((1, d), f32), ln2_b=jnp.zeros((1, d), f32),
        w_fc1=(s * jax.random.normal(ks[2], (d, hidden), f32)).astype(bf16),
        b_fc1=jnp.zeros((1, hidden), f32),
        w_fc2=(s * jax.random.normal(ks[3], (hidden, d), f32)).astype(bf16),
        b_fc2=jnp.zeros((1, d), f32),
    )


def init_params(key, *, C, patch, img_hw, Dv, Dt, heads, layers, L, vocab,
                embed_dim):
    n_patches = (img_hw // patch) ** 2
    Sv = n_patches + 1
    keys = jax.random.split(key, 8 + 2 * layers)
    s = 0.02
    f32, bf16 = jnp.float32, jnp.bfloat16
    visual = dict(
        patch_size=patch,
        w_patch=(s * jax.random.normal(keys[0], (C * patch * patch, Dv),
                                       f32)).astype(bf16),   # conv1 bias=False
        cls=s * jax.random.normal(keys[1], (1, Dv), f32),
        pos_embed=s * jax.random.normal(keys[2], (Sv, Dv), f32),
        ln_pre_g=jnp.ones((1, Dv), f32), ln_pre_b=jnp.zeros((1, Dv), f32),
        ln_post_g=jnp.ones((1, Dv), f32), ln_post_b=jnp.zeros((1, Dv), f32),
        proj=(s * jax.random.normal(keys[3], (Dv, embed_dim), f32)).astype(bf16),
        blocks=[_init_block(keys[8 + i], Dv, 4 * Dv) for i in range(layers)],
    )
    text = dict(
        tok_embed=s * jax.random.normal(keys[4], (vocab, Dt), f32),
        pos_embed=s * jax.random.normal(keys[5], (L, Dt), f32),
        ln_f_g=jnp.ones((1, Dt), f32), ln_f_b=jnp.zeros((1, Dt), f32),
        proj=(s * jax.random.normal(keys[6], (Dt, embed_dim), f32)).astype(bf16),
        blocks=[_init_block(keys[8 + layers + i], Dt, 4 * Dt)
                for i in range(layers)],
    )
    return dict(visual=visual, text=text, v_heads=heads, t_heads=heads)


# --------------------------------------------------------------------------
if __name__ == "__main__":
    key = jax.random.PRNGKey(0)
    k_img, k_txt, k_par = jax.random.split(key, 3)

    # Small shapes consistent with the module's forward, lane-dense feature dims.
    B, C, Himg, Wimg = 4, 3, 32, 32
    patch = 8                         # -> 16 patches + cls = 17 tokens
    Dv, Dt = 128, 128                 # lane-dense width (dh = 64)
    heads, layers = 2, 2
    L, vocab = 8, 64
    embed_dim = 128                   # lane-dense projection dim
    temp = 0.01                       # module default temperature

    image = jax.random.normal(k_img, (B, C, Himg, Wimg), jnp.float32)
    text_ids = jax.random.randint(k_txt, (B, L), 0, vocab, jnp.int32)
    idx = jnp.arange(B, dtype=jnp.int32)
    text_idx = jnp.arange(B, dtype=jnp.int32)

    params = init_params(k_par, C=C, patch=patch, img_hw=Himg, Dv=Dv, Dt=Dt,
                         heads=heads, layers=layers, L=L, vocab=vocab,
                         embed_dim=embed_dim)

    loss_ita, info_dict = clip_forward(params, image, text_ids, idx, text_idx,
                                       epoch=0, max_epoch=1, temp=temp)
    jax.block_until_ready(loss_ita)
    assert jnp.isfinite(loss_ita)
    print("KERNEL_OK")
</pallas_src>

<mosaic_0001>
module attributes {stable_mosaic.version = 11 : i64} {
  func.func @_patch_embed_kernel(%arg0: memref<64x192xf32, #tpu.memory_space<vmem>>, %arg1: memref<192x128xbf16, #tpu.memory_space<vmem>>, %arg2: memref<64x128xf32, #tpu.memory_space<vmem>>) attributes {dimension_semantics = [], scalar_prefetch = 0 : i64, scratch_operands = 0 : i64, tpu.core_type = #tpu.core_type<tc>} {
    %c0 = arith.constant 0 : index
    %c0_0 = arith.constant 0 : index
    %0 = vector.load %arg0[%c0, %c0_0] : memref<64x192xf32, #tpu.memory_space<vmem>>, vector<64x192xf32>
    %1 = arith.truncf %0 : vector<64x192xf32> to vector<64x192xbf16>
    %c0_1 = arith.constant 0 : index
    %c0_2 = arith.constant 0 : index
    %2 = vector.load %arg1[%c0_1, %c0_2] : memref<192x128xbf16, #tpu.memory_space<vmem>>, vector<192x128xbf16>
    %cst = arith.constant dense<0.000000e+00> : vector<64x128xf32>
    %3 = tpu.matmul %1, %2, %cst {dimension_numbers = #tpu.dot_dimension_numbers<[1], [0], [0], [1], [0, 0, 1, 1], [], []>} : vector<64x192xbf16>, vector<192x128xbf16>, vector<64x128xf32> -> vector<64x128xf32>
    %c0_3 = arith.constant 0 : index
    %c0_4 = arith.constant 0 : index
    %4 = vector.load %arg2[%c0_3, %c0_4] : memref<64x128xf32, #tpu.memory_space<vmem>>, vector<64x128xf32>
    tpu.vector_store %arg2[%c0_3, %c0_4], %3 {strides = array<i32>} : memref<64x128xf32, #tpu.memory_space<vmem>>, vector<64x128xf32>,
    return
  }
}

</mosaic_0001>

<llo_original>
// kernel: tpu_custom_call.1
$region0: #{tpu_custom_call.1}
  #allocation0 [shape = 'u32[]', space=smem, size = 0x4, offset = 0x4, fixed_abs, tag = 'smem constant byte address 0x4 - core index']
  #allocation1 [shape = 'u32[144,128]{1,0:T(1,128)}', space=vmem, size = 0x12000, scoped, tag = 'internal scratch']
  %s0 = inlined_call_operand.hbm [shape: f32[64,192], index: 0, kind: input, shape index: {}]
  %s1 = inlined_call_operand.hbm [shape: bf16[192,128], index: 1, kind: input, shape index: {}]
  %s2 = inlined_call_operand.hbm [shape: f32[64,128], index: 2, kind: output, shape index: {}]
  %s3 = sld [smem:[#allocation0]]
  $region26: #{tpu_custom_call.1} parent=0
    _
  %s5 = ssub.s32 1, %s3
  %s6 = scalar_select 0, %s5, %s3
  $region1: #{tpu_custom_call.1} parent=0
    #allocation2 [shape = 'u8[65536]{0}', space=vmem, size = 0x10000, scoped, tag = 'input window, operand 0, single buffered']
    #allocation3 [shape = 's32[1]{0}', space=sflag, size = 0x4, scoped, tag = 'scoped memory for tpu_custom_call.1']
    #allocation4 [shape = 's32[1]{0}', space=sflag, size = 0x4, scoped, tag = 'scoped memory for tpu_custom_call.1']
    #allocation5 [shape = 'u8[49152]{0}', space=vmem, size = 0xc000, scoped, tag = 'input window, operand 1, single buffered']
    #allocation6 [shape = 's32[1]{0}', space=sflag, size = 0x4, scoped, tag = 'scoped memory for tpu_custom_call.1']
    #allocation7 [shape = 'u8[32768]{0}', space=vmem, size = 0x8000, scoped, tag = 'output window, operand 0, single buffered']
    %7 = vsyncpa [#allocation3], 0
    %8 = vsyncpa [#allocation6], 0
    %9 = vsyncpa [#allocation4], 0
    // Predicated region
    $region2: #{tpu_custom_call.1} parent=1 // pred_check
      _
    $region3: #{tpu_custom_call.1} parent=1 // pred_check_branch
      %11 = sbr.rel (0) target = $region5
    $region4: #{tpu_custom_call.1} parent=1 // pred_region
      %s13 = ssub.s32 2048, 2048
      %14 = vsyncadd [#allocation3], %s13
      %s15 = sshll.u32 [#allocation2], 4
      %s16 = int_to_ptr.vmem [resolvable:$true] %s15
      %21 = dma.hbm_to_vmem [thread:$0]  %s0, 2048, %s16, [#allocation3], 256, 256, 16
    $region5: #{tpu_custom_call.1} parent=1 // pred_fallthru
      _
    // Predicated region
    $region6: #{tpu_custom_call.1} parent=1 // pred_check
      _
    $region7: #{tpu_custom_call.1} parent=1 // pred_check_branch
      %23 = sbr.rel (0) target = $region9
    $region8: #{tpu_custom_call.1} parent=1 // pred_region
      %s25 = ssub.s32 1536, 1536
      %26 = vsyncadd [#allocation6], %s25
      %s27 = sshll.u32 [#allocation5], 4
      %s28 = int_to_ptr.vmem [resolvable:$true] %s27
      %33 = dma.hbm_to_vmem [thread:$0]  %s1, 1536, %s28, [#allocation6], 64, 64, 4
    $region9: #{tpu_custom_call.1} parent=1 // pred_fallthru
      _
    // Predicated region
    $region10: #{tpu_custom_call.1} parent=1 // pred_check
      _
    $region11: #{tpu_custom_call.1} parent=1 // pred_check_branch
      %35 = sbr.rel (0) target = $region13
    $region12: #{tpu_custom_call.1} parent=1 // pred_region
      %36 = dma.done [#allocation3], 2048
    $region13: #{tpu_custom_call.1} parent=1 // pred_fallthru
      _
    // Predicated region
    $region14: #{tpu_custom_call.1} parent=1 // pred_check
      _
    $region15: #{tpu_custom_call.1} parent=1 // pred_check_branch
      %38 = sbr.rel (0) target = $region17
    $region16: #{tpu_custom_call.1} parent=1 // pred_region
      %39 = dma.done [#allocation6], 1536
    $region17: #{tpu_custom_call.1} parent=1 // pred_fallthru
      _
    %v41 = vld [vmem:[#allocation2] sm:$0xff]
    %v42 = vld [vmem:[#allocation2 + $0x8] sm:$0xff]
    %v43 = vld [vmem:[#allocation2 + $0x10] sm:$0xff]
    %v44 = vld [vmem:[#allocation2 + $0x18] sm:$0xff]
    %v45 = vld [vmem:[#allocation2 + $0x20] sm:$0xff]
    %v46 = vld [vmem:[#allocation2 + $0x28] sm:$0xff]
    %v47 = vld [vmem:[#allocation2 + $0x30] sm:$0xff]
    %v48 = vld [vmem:[#allocation2 + $0x38] sm:$0xff]
    %v49 = vld [vmem:[#allocation2 + $0x40] sm:$0xff]
    %v50 = vld [vmem:[#allocation2 + $0x48] sm:$0xff]
    %v51 = vld [vmem:[#allocation2 + $0x50] sm:$0xff]
    %v52 = vld [vmem:[#allocation2 + $0x58] sm:$0xff]
    %v53 = vld [vmem:[#allocation2 + $0x60] sm:$0xff]
    %v54 = vld [vmem:[#allocation2 + $0x68] sm:$0xff]
    %v55 = vld [vmem:[#allocation2 + $0x70] sm:$0xff]
    %v56 = vld [vmem:[#allocation2 + $0x78] sm:$0xff]
    %v57 = vpack.c.bf16 %v43, %v41
    %v58 = vpack.c.bf16 %v44, %v42
    %v59 = vpack.c.bf16 %v47, %v45
    %v60 = vpack.c.bf16 %v48, %v46
    %v61 = vpack.c.bf16 %v51, %v49
    %v62 = vpack.c.bf16 %v52, %v50
    %v63 = vpack.c.bf16 %v55, %v53
    %v64 = vpack.c.bf16 %v56, %v54
    %v65 = vld [vmem:[#allocation5] sm:$0xf]
    %v66 = vld [vmem:[#allocation5 + $0x4] sm:$0xf]
    %v67 = vld [vmem:[#allocation5 + $0x8] sm:$0xf]
    %v68 = vld [vmem:[#allocation5 + $0xc] sm:$0xf]
    %v69 = vld [vmem:[#allocation5 + $0x10] sm:$0xf]
    %v70 = vld [vmem:[#allocation5 + $0x14] sm:$0xf]
    %v71 = vld [vmem:[#allocation5 + $0x18] sm:$0xf]
    %v72 = vld [vmem:[#allocation5 + $0x1c] sm:$0xf]
    %v73 = vld [vmem:[#allocation5 + $0x20] sm:$0xf]
    %v74 = vld [vmem:[#allocation5 + $0x24] sm:$0xf]
    %v75 = vld [vmem:[#allocation5 + $0x28] sm:$0xf]
    %v76 = vld [vmem:[#allocation5 + $0x2c] sm:$0xf]
    %v77 = vld [vmem:[#allocation5 + $0x30] sm:$0xf]
    %v78 = vld [vmem:[#allocation5 + $0x34] sm:$0xf]
    %v79 = vld [vmem:[#allocation5 + $0x38] sm:$0xf]
    %v80 = vld [vmem:[#allocation5 + $0x3c] sm:$0xf]
    %v81 = vld [vmem:[#allocation5 + $0x40] sm:$0xf]
    %v82 = vld [vmem:[#allocation5 + $0x44] sm:$0xf]
    %v83 = vld [vmem:[#allocation5 + $0x48] sm:$0xf]
    %v84 = vld [vmem:[#allocation5 + $0x4c] sm:$0xf]
    %v85 = vld [vmem:[#allocation5 + $0x50] sm:$0xf]
    %v86 = vld [vmem:[#allocation5 + $0x54] sm:$0xf]
    %v87 = vld [vmem:[#allocation5 + $0x58] sm:$0xf]
    %v88 = vld [vmem:[#allocation5 + $0x5c] sm:$0xf]
    %v113 = vunpack.c.l.b16 %v65
    %v114 = vunpack.c.l.b16 %v66
    %v115 = vunpack.c.l.b16 %v67
    %v116 = vunpack.c.l.b16 %v68
    %v117 = vunpack.c.l.b16 %v69
    %v118 = vunpack.c.l.b16 %v70
    %v119 = vunpack.c.l.b16 %v71
    %v120 = vunpack.c.l.b16 %v72
    %v121 = vunpack.c.l.b16 %v73
    %v122 = vunpack.c.l.b16 %v74
    %v123 = vunpack.c.l.b16 %v75
    %v124 = vunpack.c.l.b16 %v76
    %v125 = vunpack.c.l.b16 %v77
    %v126 = vunpack.c.l.b16 %v78
    %v127 = vunpack.c.l.b16 %v79
    %v128 = vunpack.c.l.b16 %v80
    %v129 = vunpack.c.l.b16 %v81
    %v130 = vunpack.c.l.b16 %v82
    %v131 = vunpack.c.l.b16 %v83
    %v132 = vunpack.c.l.b16 %v84
    %v133 = vunpack.c.l.b16 %v85
    %v134 = vunpack.c.l.b16 %v86
    %v135 = vunpack.c.l.b16 %v87
    %v136 = vunpack.c.l.b16 %v88
    %v137 = vpack.c.b16 %v114, %v113
    %v138 = vpack.c.b16 %v116, %v115
    %v139 = vpack.c.b16 %v118, %v117
    %v140 = vpack.c.b16 %v120, %v119
    %v141 = vpack.c.b16 %v122, %v121
    %v142 = vpack.c.b16 %v124, %v123
    %v143 = vpack.c.b16 %v126, %v125
    %v144 = vpack.c.b16 %v128, %v127
    %v145 = vpack.c.b16 %v130, %v129
    %v146 = vpack.c.b16 %v132, %v131
    %v147 = vpack.c.b16 %v134, %v133
    %v148 = vpack.c.b16 %v136, %v135
    %vm161 = vcmask 523264
    %v163 = vsel %vm161, %v58, 0
    %v166 = vsel %vm161, %v60, 0
    %v169 = vsel %vm161, %v62, 0
    %v172 = vsel %vm161, %v64, 0
    %174 = vmatprep.subr.bf16.mxu0 0
    %175 = vmatpush1.bf16.msra.mxu0 %v137
    %176 = vmatprep.subr.bf16.mxu0 0
    %177 = vmatpush1.bf16.msra.mxu0 %v138
    %178 = vmatprep.subr.bf16.mxu0 0
    %179 = vmatpush1.bf16.msra.mxu0 %v139
    %180 = vmatprep.subr.bf16.mxu0 0
    %181 = vmatpush1.bf16.msra.mxu0 %v140
    %182 = vmatprep.subr.bf16.mxu0 0
    %183 = vmatpush1.bf16.msra.mxu0 %v141
    %184 = vmatprep.subr.bf16.mxu0 0
    %185 = vmatpush1.bf16.msra.mxu0 %v142
    %186 = vmatprep.subr.bf16.mxu0 0
    %187 = vmatpush1.bf16.msra.mxu0 %v143
    %188 = vmatprep.subr.bf16.mxu0 0
    %189 = vmatpush1.bf16.msra.mxu0 %v144
    %190 = vmatprep.subr.bf16.mxu0 0
    %191 = vmatpush1.bf16.msra.mxu0 %v145
    %192 = vmatprep.subr.bf16.mxu0 0
    %193 = vmatpush1.bf16.msra.mxu0 %v146
    %194 = vmatprep.subr.bf16.mxu0 0
    %195 = vmatpush1.bf16.msra.mxu0 %v147
    %196 = vmatprep.subr.bf16.mxu0 0
    %197 = vmatpush1.bf16.msra.mxu0 %v148
    %198 = vmatprep.subr.bf16.mxu0 0
    %199 = vmatpush1.bf16.msra.mxu0 0
    %200 = vmatprep.subr.bf16.mxu0 0
    %201 = vmatpush1.bf16.msra.mxu0 0
    %202 = vmatprep.subr.bf16.mxu0 0
    %203 = vmatpush1.bf16.msra.mxu0 0
    %204 = vmatprep.subr.bf16.mxu0 0
    %205 = vmatpush1.bf16.msra.mxu0 0
    %206 = vmatprep.mubr.bf16.mxu0 %v163
    %207 = vmatmul.mubr.bf16.gmra.mrb[0].mxu0 %v57
    %v208 = vpop.f32.mrb[0].mxu0
    %v209 = vadd.f32 0.0, %v208
    %v210 = vpop.f32.mrb[0].mxu0
    %v211 = vpop.f32.mrb[0].mxu0
    %v212 = vadd.f32 0.0, %v211
    %v213 = vpop.f32.mrb[0].mxu0
    %214 = vmatprep.mubr.bf16.mxu0 %v166
    %215 = vmatmul.mubr.bf16.gmra.mrb[0].mxu0 %v59
    %v216 = vpop.f32.mrb[0].mxu0
    %v217 = vadd.f32 0.0, %v216
    %v218 = vpop.f32.mrb[0].mxu0
    %v219 = vpop.f32.mrb[0].mxu0
    %v220 = vadd.f32 0.0, %v219
    %v221 = vpop.f32.mrb[0].mxu0
    %222 = vmatprep.mubr.bf16.mxu0 %v169
    %223 = vmatmul.mubr.bf16.gmra.mrb[0].mxu0 %v61
    %v224 = vpop.f32.mrb[0].mxu0
    %v225 = vadd.f32 0.0, %v224
    %v226 = vpop.f32.mrb[0].mxu0
    %v227 = vpop.f32.mrb[0].mxu0
    %v228 = vadd.f32 0.0, %v227
    %v229 = vpop.f32.mrb[0].mxu0
    %230 = vmatprep.mubr.bf16.mxu0 %v172
    %231 = vmatmul.mubr.bf16.gmra.mrb[0].mxu0 %v63
    %v232 = vpop.f32.mrb[0].mxu0
    %v233 = vadd.f32 0.0, %v232
    %v234 = vpop.f32.mrb[0].mxu0
    %v235 = vpop.f32.mrb[0].mxu0
    %v236 = vadd.f32 0.0, %v235
    %v237 = vpop.f32.mrb[0].mxu0
    %238 = vdwg.mxu0
    %239 = vst [vmem:[#allocation7] sm:$0xff] %v209
    %240 = vst [vmem:[#allocation7 + $0x8] sm:$0xff] %v212
    %241 = vst [vmem:[#allocation7 + $0x10] sm:$0xff] %v217
    %242 = vst [vmem:[#allocation7 + $0x18] sm:$0xff] %v220
    %243 = vst [vmem:[#allocation7 + $0x20] sm:$0xff] %v225
    %244 = vst [vmem:[#allocation7 + $0x28] sm:$0xff] %v228
    %245 = vst [vmem:[#allocation7 + $0x30] sm:$0xff] %v233
    %246 = vst [vmem:[#allocation7 + $0x38] sm:$0xff] %v236
    // Predicated region
    $region18: #{tpu_custom_call.1} parent=1 // pred_check
      _
    $region19: #{tpu_custom_call.1} parent=1 // pred_check_branch
      %248 = sbr.rel (0) target = $region21
    $region20: #{tpu_custom_call.1} parent=1 // pred_region
      %s250 = ssub.s32 1024, 1024
      %251 = vsyncadd [#allocation4], %s250
      %s252 = sshll.u32 [#allocation7], 4
      %s253 = int_to_ptr.vmem [resolvable:$true] %s252
      %258 = dma.vmem_to_hbm [thread:$0]  %s253, 1024, %s2, [#allocation4], 128, 128, 8
    $region21: #{tpu_custom_call.1} parent=1 // pred_fallthru
      _
    // Predicated region
    $region22: #{tpu_custom_call.1} parent=1 // pred_check
      _
    $region23: #{tpu_custom_call.1} parent=1 // pred_check_branch
      %260 = sbr.rel (0) target = $region25
    $region24: #{tpu_custom_call.1} parent=1 // pred_region
      %261 = dma.done [#allocation4], 1024
    $region25: #{tpu_custom_call.1} parent=1 // pred_fallthru
      _
    %262 = vsyncpa [#allocation3], 1
    %263 = vsyncpa [#allocation6], 1
    %264 = vsyncpa [#allocation4], 1

</llo_original>
